<compile_context>
chip_gen: v6e
topology: v6e:2x2x1
jax: 0.10.0
libtpu: 0.0.40
codegen_flags: <defaults>
</compile_context>

<pallas_src>
import functools

import jax
import jax.numpy as jnp
from jax.experimental import pallas as pl
from jax.experimental.pallas import tpu as pltpu


def _pconv_kernel(x_ref, w_ref, o_ref, *, Cc, H, W, KH, KW, ph, pw,
                  copy_untouched):
    """One batch tile: KHxKW 'same' conv over the first Cc channels.

    x_ref: (TB, 1, L) VMEM   L = Cc*H*W (or C*H*W on the fallback path)
    w_ref: (Cc*Cc*KH*KW,) SMEM  conv weights, flattened OIHW
    o_ref: (TB, 1, L) VMEM   HBM-aliased with the full input buffer
    """
    HW = H * W
    Lc = Cc * HW

    x = x_ref[:, 0, :]                        # (TB, L), native dtype
    xc = x[:, :Lc].astype(jnp.float32)        # flattened conv slab, lane-dense

    # Static per-plane (row, col) coordinate of every flattened lane, used to
    # zero the out-of-image positions that the lane rolls wrap around.
    lin = jax.lax.broadcasted_iota(jnp.int32, (1, Lc), 1)
    if (W & (W - 1)) == 0 and (HW & (HW - 1)) == 0:
        w_idx = lin & (W - 1)                              # bit ops only (VPU)
        h_idx = (lin & (HW - 1)) >> (W.bit_length() - 1)
    else:
        pos = lin % HW                                     # general path
        h_idx = pos // W
        w_idx = pos - h_idx * W

    tb = x.shape[0]
    acc = [jnp.zeros((tb, HW), jnp.float32) for _ in range(Cc)]

    # Fully unrolled taps: one XLU roll + one edge mask aligns *all* Cc input
    # planes with tap (dy, dx) at once; each (ci -> co) contribution is then a
    # single lane-dense VPU FMA with a scalar SMEM weight.
    # TODO(synk): for Cc >~ 8-16 switch to an im2col (HW_strip, 9*Cc) x
    # (9*Cc, Cc) MXU matmul and add an H-strip grid axis (KH-1 row halo) to
    # bound accumulator vregs / VMEM for large images.
    # TODO(synk): on v6e/v7x do the tap multiplies in bf16 (f32 accumulate)
    # when the production dtype is bf16; keep f32 on v5e (no bf16 VPU).
    for kh in range(KH):
        dy = kh - ph
        for kw in range(KW):
            dx = kw - pw
            s = dy * W + dx
            # Rolling the whole flat slab is safe: any lane that wraps across a
            # row / plane boundary corresponds to an out-of-image read and is
            # zeroed by the mask below.
            shifted = pltpu.roll(xc, shift=(-s) % Lc, axis=1) if s else xc
            conds = []
            if dy > 0:
                conds.append(h_idx < H - dy)
            if dy < 0:
                conds.append(h_idx >= -dy)
            if dx > 0:
                conds.append(w_idx < W - dx)
            if dx < 0:
                conds.append(w_idx >= -dx)
            if conds:
                m = conds[0]
                for c in conds[1:]:
                    m = m & c
                shifted = jnp.where(m, shifted, 0.0)
            for ci in range(Cc):
                plane = shifted[:, ci * HW:(ci + 1) * HW]      # (TB, HW)
                for co in range(Cc):
                    wv = w_ref[((co * Cc + ci) * KH + kh) * KW + kw]
                    acc[co] = acc[co] + plane * wv

    out = jnp.concatenate(acc, axis=1).astype(o_ref.dtype)     # (TB, Cc*HW)
    if copy_untouched:
        # Fallback when Cc*H*W is not 128-aligned: the block carries all C
        # channels, so pass the untouched ones through explicitly.
        o_ref[:, 0, Lc:] = x[:, Lc:]
        o_ref[:, 0, :Lc] = out
    else:
        o_ref[:, 0, :] = out


def _pick_batch_tile(n, per_elem_bytes, target_bytes=1 << 20):
    """Images per grid step: largest divisor of n with block <= target_bytes,
    leaving >= 2 grid steps so both v7x TensorCores get work.  ~1 MiB blocks
    amortize the ~0.35 us/step pipeline cost and keep 2x(in)+2x(out) well
    under every chip's scoped-VMEM default (incl. v7x's 64 MiB/TC)."""
    cap = max(1, target_bytes // max(per_elem_bytes, 1))
    cap = min(cap, max(1, n // 2))
    tb = 1
    for cand in range(2, cap + 1):
        if n % cand == 0:
            tb = cand
    return tb


def pconv2d_forward(x, weight, n_div=4):
    """x: (N, C, H, W) NCHW; weight: (Cc, Cc, KH, KW) OIHW (PyTorch conv)."""
    N, C, H, W = x.shape
    Cc = C // n_div
    KH, KW = weight.shape[2], weight.shape[3]
    ph, pw = (KH - 1) // 2, (KW - 1) // 2

    lane_full = C * H * W
    lane_conv = Cc * H * W
    # Lane-dense fast path needs the conv slab width to be a multiple of 128;
    # otherwise stream all C channels and copy the untouched ones through.
    copy_untouched = (lane_conv % 128 != 0) and (lane_conv != lane_full)
    lane_blk = lane_full if copy_untouched else lane_conv

    # Free (N, 1, C*H*W) view: flattened image on the lane axis, batch tile on
    # the unconstrained leading block axis.
    xf = x.reshape(N, 1, lane_full)
    w_flat = weight.astype(jnp.float32).reshape(-1)

    tb = _pick_batch_tile(N, lane_blk * jnp.dtype(x.dtype).itemsize)
    grid = (N // tb,)

    kernel = functools.partial(_pconv_kernel, Cc=Cc, H=H, W=W, KH=KH, KW=KW,
                               ph=ph, pw=pw, copy_untouched=copy_untouched)

    out = pl.pallas_call(
        kernel,
        out_shape=jax.ShapeDtypeStruct((N, 1, lane_full), x.dtype),
        grid=grid,
        in_specs=[
            # Only the conv channels are streamed into VMEM.
            pl.BlockSpec((tb, 1, lane_blk), lambda n: (n, 0, 0)),
            pl.BlockSpec(memory_space=pltpu.MemorySpace.SMEM),
        ],
        out_specs=pl.BlockSpec((tb, 1, lane_blk), lambda n: (n, 0, 0)),
        # Full input aliases the full output: lanes >= Cc*H*W are never covered
        # by an output block and keep the aliased input's contents (this
        # replaces jnp.concatenate([y1, x2], axis=1)).
        input_output_aliases={0: 0},
        compiler_params=pltpu.CompilerParams(
            dimension_semantics=("parallel",),
        ),
    )(xf, w_flat)
    return out.reshape(N, C, H, W)


def reference_forward(x, weight, n_div=4):
    """Pure-JAX reference matching PyTorch PConv2d.forward semantics."""
    C = x.shape[1]
    Cc = C // n_div
    x1, x2 = x[:, :Cc], x[:, Cc:]
    pad = (weight.shape[2] - 1) // 2
    y1 = jax.lax.conv_general_dilated(
        x1, weight, window_strides=(1, 1),
        padding=((pad, pad), (pad, pad)),
        dimension_numbers=("NCHW", "OIHW", "NCHW"))
    return jnp.concatenate([y1, x2], axis=1)


if __name__ == "__main__":
    # Shapes consistent with the module: dim=8, n_div=4 -> dim_conv3=2.
    N, C, H, W = 2, 8, 16, 16
    n_div, ksize = 4, 3
    Cc = C // n_div

    key = jax.random.PRNGKey(0)
    kx, kw = jax.random.split(key)
    x = jax.random.normal(kx, (N, C, H, W), dtype=jnp.float32)
    weight = jax.random.normal(kw, (Cc, Cc, ksize, ksize), dtype=jnp.float32) * 0.1

    ref = jax.block_until_ready(reference_forward(x, weight, n_div=n_div))
    out = jax.block_until_ready(pconv2d_forward(x, weight, n_div=n_div))

    assert out.shape == (N, C, H, W), out.shape
    # Covers both the conv channels and the aliased pass-through channels.
    assert jnp.allclose(out, ref, atol=1e-4, rtol=1e-4), "mismatch vs reference"

    print("KERNEL_OK")
</pallas_src>

<mosaic_0001>
module attributes {stable_mosaic.version = 11 : i64} {
  func.func @_pconv_kernel(%arg0: i32, %arg1: memref<1x1x512xf32, #tpu.memory_space<vmem>>, %arg2: memref<36xf32, #tpu.memory_space<smem>>, %arg3: memref<1x1x512xf32, #tpu.memory_space<vmem>>) attributes {dimension_semantics = [#tpu.dimension_semantics<parallel>], iteration_bounds = array<i64: 2>, scalar_prefetch = 0 : i64, scratch_operands = 0 : i64, tpu.core_type = #tpu.core_type<tc>, window_params = [{transform_indices = @transform_0, window_bounds = array<i64: 1, 1, 512>}, {transform_indices = @transform_1, window_bounds = array<i64: 36>}, {transform_indices = @transform_2, window_bounds = array<i64: 1, 1, 512>}]} {
    %c0 = arith.constant 0 : index
    %c0_0 = arith.constant 0 : index
    %c0_1 = arith.constant 0 : index
    %0 = vector.load %arg1[%c0, %c0_0, %c0_1] : memref<1x1x512xf32, #tpu.memory_space<vmem>>, vector<1x1x512xf32>
    %1 = vector.shape_cast %0 : vector<1x1x512xf32> to vector<1x512xf32>
    %2 = tpu.iota {dimensions = array<i32: 1>} : vector<1x512xi32>
    %c15_i32 = arith.constant 15 : i32
    %3 = vector.broadcast %c15_i32 : i32 to vector<1x512xi32>
    %4 = arith.andi %2, %3 : vector<1x512xi32>
    %c255_i32 = arith.constant 255 : i32
    %5 = vector.broadcast %c255_i32 : i32 to vector<1x512xi32>
    %6 = arith.andi %2, %5 : vector<1x512xi32>
    %c4_i32 = arith.constant 4 : i32
    %7 = vector.broadcast %c4_i32 : i32 to vector<1x512xi32>
    %8 = arith.shrsi %6, %7 : vector<1x512xi32>
    %cst = arith.constant 0.000000e+00 : f32
    %9 = vector.broadcast %cst : f32 to vector<1x256xf32>
    %cst_2 = arith.constant 0.000000e+00 : f32
    %10 = vector.broadcast %cst_2 : f32 to vector<1x256xf32>
    %c17_i32 = arith.constant 17 : i32
    %11 = tpu.dynamic_rotate %1 by %c17_i32 dim 1 : vector<1x512xf32>, i32 -> vector<1x512xf32>
    %c1_i32 = arith.constant 1 : i32
    %12 = vector.broadcast %c1_i32 : i32 to vector<1x512xi32>
    %13 = arith.cmpi sge, %8, %12 : vector<1x512xi32>
    %c1_i32_3 = arith.constant 1 : i32
    %14 = vector.broadcast %c1_i32_3 : i32 to vector<1x512xi32>
    %15 = arith.cmpi sge, %4, %14 : vector<1x512xi32>
    %16 = arith.andi %13, %15 : vector<1x512xi1>
    %cst_4 = arith.constant 0.000000e+00 : f32
    %17 = vector.broadcast %cst_4 : f32 to vector<1x512xf32>
    %18 = arith.select %16, %11, %17 : vector<1x512xi1>, vector<1x512xf32>
    %19 = vector.extract_strided_slice %18 {offsets = [0, 0], sizes = [1, 256], strides = [1, 1]} : vector<1x512xf32> to vector<1x256xf32>
    %c0_5 = arith.constant 0 : index
    %20 = memref.load %arg2[%c0_5] : memref<36xf32, #tpu.memory_space<smem>>
    %21 = vector.broadcast %20 : f32 to vector<1x256xf32>
    %22 = arith.mulf %19, %21 : vector<1x256xf32>
    %23 = arith.addf %9, %22 : vector<1x256xf32>
    %c18 = arith.constant 18 : index
    %24 = memref.load %arg2[%c18] : memref<36xf32, #tpu.memory_space<smem>>
    %25 = vector.broadcast %24 : f32 to vector<1x256xf32>
    %26 = arith.mulf %19, %25 : vector<1x256xf32>
    %27 = arith.addf %10, %26 : vector<1x256xf32>
    %28 = vector.extract_strided_slice %18 {offsets = [0, 256], sizes = [1, 256], strides = [1, 1]} : vector<1x512xf32> to vector<1x256xf32>
    %c9 = arith.constant 9 : index
    %29 = memref.load %arg2[%c9] : memref<36xf32, #tpu.memory_space<smem>>
    %30 = vector.broadcast %29 : f32 to vector<1x256xf32>
    %31 = arith.mulf %28, %30 : vector<1x256xf32>
    %32 = arith.addf %23, %31 : vector<1x256xf32>
    %c27 = arith.constant 27 : index
    %33 = memref.load %arg2[%c27] : memref<36xf32, #tpu.memory_space<smem>>
    %34 = vector.broadcast %33 : f32 to vector<1x256xf32>
    %35 = arith.mulf %28, %34 : vector<1x256xf32>
    %36 = arith.addf %27, %35 : vector<1x256xf32>
    %c16_i32 = arith.constant 16 : i32
    %37 = tpu.dynamic_rotate %1 by %c16_i32 dim 1 : vector<1x512xf32>, i32 -> vector<1x512xf32>
    %c1_i32_6 = arith.constant 1 : i32
    %38 = vector.broadcast %c1_i32_6 : i32 to vector<1x512xi32>
    %39 = arith.cmpi sge, %8, %38 : vector<1x512xi32>
    %cst_7 = arith.constant 0.000000e+00 : f32
    %40 = vector.broadcast %cst_7 : f32 to vector<1x512xf32>
    %41 = arith.select %39, %37, %40 : vector<1x512xi1>, vector<1x512xf32>
    %42 = vector.extract_strided_slice %41 {offsets = [0, 0], sizes = [1, 256], strides = [1, 1]} : vector<1x512xf32> to vector<1x256xf32>
    %c1 = arith.constant 1 : index
    %43 = memref.load %arg2[%c1] : memref<36xf32, #tpu.memory_space<smem>>
    %44 = vector.broadcast %43 : f32 to vector<1x256xf32>
    %45 = arith.mulf %42, %44 : vector<1x256xf32>
    %46 = arith.addf %32, %45 : vector<1x256xf32>
    %c19 = arith.constant 19 : index
    %47 = memref.load %arg2[%c19] : memref<36xf32, #tpu.memory_space<smem>>
    %48 = vector.broadcast %47 : f32 to vector<1x256xf32>
    %49 = arith.mulf %42, %48 : vector<1x256xf32>
    %50 = arith.addf %36, %49 : vector<1x256xf32>
    %51 = vector.extract_strided_slice %41 {offsets = [0, 256], sizes = [1, 256], strides = [1, 1]} : vector<1x512xf32> to vector<1x256xf32>
    %c10 = arith.constant 10 : index
    %52 = memref.load %arg2[%c10] : memref<36xf32, #tpu.memory_space<smem>>
    %53 = vector.broadcast %52 : f32 to vector<1x256xf32>
    %54 = arith.mulf %51, %53 : vector<1x256xf32>
    %55 = arith.addf %46, %54 : vector<1x256xf32>
    %c28 = arith.constant 28 : index
    %56 = memref.load %arg2[%c28] : memref<36xf32, #tpu.memory_space<smem>>
    %57 = vector.broadcast %56 : f32 to vector<1x256xf32>
    %58 = arith.mulf %51, %57 : vector<1x256xf32>
    %59 = arith.addf %50, %58 : vector<1x256xf32>
    %c15_i32_8 = arith.constant 15 : i32
    %60 = tpu.dynamic_rotate %1 by %c15_i32_8 dim 1 : vector<1x512xf32>, i32 -> vector<1x512xf32>
    %c1_i32_9 = arith.constant 1 : i32
    %61 = vector.broadcast %c1_i32_9 : i32 to vector<1x512xi32>
    %62 = arith.cmpi sge, %8, %61 : vector<1x512xi32>
    %c15_i32_10 = arith.constant 15 : i32
    %63 = vector.broadcast %c15_i32_10 : i32 to vector<1x512xi32>
    %64 = arith.cmpi slt, %4, %63 : vector<1x512xi32>
    %65 = arith.andi %62, %64 : vector<1x512xi1>
    %cst_11 = arith.constant 0.000000e+00 : f32
    %66 = vector.broadcast %cst_11 : f32 to vector<1x512xf32>
    %67 = arith.select %65, %60, %66 : vector<1x512xi1>, vector<1x512xf32>
    %68 = vector.extract_strided_slice %67 {offsets = [0, 0], sizes = [1, 256], strides = [1, 1]} : vector<1x512xf32> to vector<1x256xf32>
    %c2 = arith.constant 2 : index
    %69 = memref.load %arg2[%c2] : memref<36xf32, #tpu.memory_space<smem>>
    %70 = vector.broadcast %69 : f32 to vector<1x256xf32>
    %71 = arith.mulf %68, %70 : vector<1x256xf32>
    %72 = arith.addf %55, %71 : vector<1x256xf32>
    %c20 = arith.constant 20 : index
    %73 = memref.load %arg2[%c20] : memref<36xf32, #tpu.memory_space<smem>>
    %74 = vector.broadcast %73 : f32 to vector<1x256xf32>
    %75 = arith.mulf %68, %74 : vector<1x256xf32>
    %76 = arith.addf %59, %75 : vector<1x256xf32>
    %77 = vector.extract_strided_slice %67 {offsets = [0, 256], sizes = [1, 256], strides = [1, 1]} : vector<1x512xf32> to vector<1x256xf32>
    %c11 = arith.constant 11 : index
    %78 = memref.load %arg2[%c11] : memref<36xf32, #tpu.memory_space<smem>>
    %79 = vector.broadcast %78 : f32 to vector<1x256xf32>
    %80 = arith.mulf %77, %79 : vector<1x256xf32>
    %81 = arith.addf %72, %80 : vector<1x256xf32>
    %c29 = arith.constant 29 : index
    %82 = memref.load %arg2[%c29] : memref<36xf32, #tpu.memory_space<smem>>
    %83 = vector.broadcast %82 : f32 to vector<1x256xf32>
    %84 = arith.mulf %77, %83 : vector<1x256xf32>
    %85 = arith.addf %76, %84 : vector<1x256xf32>
    %c1_i32_12 = arith.constant 1 : i32
    %86 = tpu.dynamic_rotate %1 by %c1_i32_12 dim 1 : vector<1x512xf32>, i32 -> vector<1x512xf32>
    %c1_i32_13 = arith.constant 1 : i32
    %87 = vector.broadcast %c1_i32_13 : i32 to vector<1x512xi32>
    %88 = arith.cmpi sge, %4, %87 : vector<1x512xi32>
    %cst_14 = arith.constant 0.000000e+00 : f32
    %89 = vector.broadcast %cst_14 : f32 to vector<1x512xf32>
    %90 = arith.select %88, %86, %89 : vector<1x512xi1>, vector<1x512xf32>
    %91 = vector.extract_strided_slice %90 {offsets = [0, 0], sizes = [1, 256], strides = [1, 1]} : vector<1x512xf32> to vector<1x256xf32>
    %c3 = arith.constant 3 : index
    %92 = memref.load %arg2[%c3] : memref<36xf32, #tpu.memory_space<smem>>
    %93 = vector.broadcast %92 : f32 to vector<1x256xf32>
    %94 = arith.mulf %91, %93 : vector<1x256xf32>
    %95 = arith.addf %81, %94 : vector<1x256xf32>
    %c21 = arith.constant 21 : index
    %96 = memref.load %arg2[%c21] : memref<36xf32, #tpu.memory_space<smem>>
    %97 = vector.broadcast %96 : f32 to vector<1x256xf32>
    %98 = arith.mulf %91, %97 : vector<1x256xf32>
    %99 = arith.addf %85, %98 : vector<1x256xf32>
    %100 = vector.extract_strided_slice %90 {offsets = [0, 256], sizes = [1, 256], strides = [1, 1]} : vector<1x512xf32> to vector<1x256xf32>
    %c12 = arith.constant 12 : index
    %101 = memref.load %arg2[%c12] : memref<36xf32, #tpu.memory_space<smem>>
    %102 = vector.broadcast %101 : f32 to vector<1x256xf32>
    %103 = arith.mulf %100, %102 : vector<1x256xf32>
    %104 = arith.addf %95, %103 : vector<1x256xf32>
    %c30 = arith.constant 30 : index
    %105 = memref.load %arg2[%c30] : memref<36xf32, #tpu.memory_space<smem>>
    %106 = vector.broadcast %105 : f32 to vector<1x256xf32>
    %107 = arith.mulf %100, %106 : vector<1x256xf32>
    %108 = arith.addf %99, %107 : vector<1x256xf32>
    %109 = vector.extract_strided_slice %1 {offsets = [0, 0], sizes = [1, 256], strides = [1, 1]} : vector<1x512xf32> to vector<1x256xf32>
    %c4 = arith.constant 4 : index
    %110 = memref.load %arg2[%c4] : memref<36xf32, #tpu.memory_space<smem>>
    %111 = vector.broadcast %110 : f32 to vector<1x256xf32>
    %112 = arith.mulf %109, %111 : vector<1x256xf32>
    %113 = arith.addf %104, %112 : vector<1x256xf32>
    %c22 = arith.constant 22 : index
    %114 = memref.load %arg2[%c22] : memref<36xf32, #tpu.memory_space<smem>>
    %115 = vector.broadcast %114 : f32 to vector<1x256xf32>
    %116 = arith.mulf %109, %115 : vector<1x256xf32>
    %117 = arith.addf %108, %116 : vector<1x256xf32>
    %118 = vector.extract_strided_slice %1 {offsets = [0, 256], sizes = [1, 256], strides = [1, 1]} : vector<1x512xf32> to vector<1x256xf32>
    %c13 = arith.constant 13 : index
    %119 = memref.load %arg2[%c13] : memref<36xf32, #tpu.memory_space<smem>>
    %120 = vector.broadcast %119 : f32 to vector<1x256xf32>
    %121 = arith.mulf %118, %120 : vector<1x256xf32>
    %122 = arith.addf %113, %121 : vector<1x256xf32>
    %c31 = arith.constant 31 : index
    %123 = memref.load %arg2[%c31] : memref<36xf32, #tpu.memory_space<smem>>
    %124 = vector.broadcast %123 : f32 to vector<1x256xf32>
    %125 = arith.mulf %118, %124 : vector<1x256xf32>
    %126 = arith.addf %117, %125 : vector<1x256xf32>
    %c511_i32 = arith.constant 511 : i32
    %127 = tpu.dynamic_rotate %1 by %c511_i32 dim 1 : vector<1x512xf32>, i32 -> vector<1x512xf32>
    %c15_i32_15 = arith.constant 15 : i32
    %128 = vector.broadcast %c15_i32_15 : i32 to vector<1x512xi32>
    %129 = arith.cmpi slt, %4, %128 : vector<1x512xi32>
    %cst_16 = arith.constant 0.000000e+00 : f32
    %130 = vector.broadcast %cst_16 : f32 to vector<1x512xf32>
    %131 = arith.select %129, %127, %130 : vector<1x512xi1>, vector<1x512xf32>
    %132 = vector.extract_strided_slice %131 {offsets = [0, 0], sizes = [1, 256], strides = [1, 1]} : vector<1x512xf32> to vector<1x256xf32>
    %c5 = arith.constant 5 : index
    %133 = memref.load %arg2[%c5] : memref<36xf32, #tpu.memory_space<smem>>
    %134 = vector.broadcast %133 : f32 to vector<1x256xf32>
    %135 = arith.mulf %132, %134 : vector<1x256xf32>
    %136 = arith.addf %122, %135 : vector<1x256xf32>
    %c23 = arith.constant 23 : index
    %137 = memref.load %arg2[%c23] : memref<36xf32, #tpu.memory_space<smem>>
    %138 = vector.broadcast %137 : f32 to vector<1x256xf32>
    %139 = arith.mulf %132, %138 : vector<1x256xf32>
    %140 = arith.addf %126, %139 : vector<1x256xf32>
    %141 = vector.extract_strided_slice %131 {offsets = [0, 256], sizes = [1, 256], strides = [1, 1]} : vector<1x512xf32> to vector<1x256xf32>
    %c14 = arith.constant 14 : index
    %142 = memref.load %arg2[%c14] : memref<36xf32, #tpu.memory_space<smem>>
    %143 = vector.broadcast %142 : f32 to vector<1x256xf32>
    %144 = arith.mulf %141, %143 : vector<1x256xf32>
    %145 = arith.addf %136, %144 : vector<1x256xf32>
    %c32 = arith.constant 32 : index
    %146 = memref.load %arg2[%c32] : memref<36xf32, #tpu.memory_space<smem>>
    %147 = vector.broadcast %146 : f32 to vector<1x256xf32>
    %148 = arith.mulf %141, %147 : vector<1x256xf32>
    %149 = arith.addf %140, %148 : vector<1x256xf32>
    %c497_i32 = arith.constant 497 : i32
    %150 = tpu.dynamic_rotate %1 by %c497_i32 dim 1 : vector<1x512xf32>, i32 -> vector<1x512xf32>
    %c15_i32_17 = arith.constant 15 : i32
    %151 = vector.broadcast %c15_i32_17 : i32 to vector<1x512xi32>
    %152 = arith.cmpi slt, %8, %151 : vector<1x512xi32>
    %c1_i32_18 = arith.constant 1 : i32
    %153 = vector.broadcast %c1_i32_18 : i32 to vector<1x512xi32>
    %154 = arith.cmpi sge, %4, %153 : vector<1x512xi32>
    %155 = arith.andi %152, %154 : vector<1x512xi1>
    %cst_19 = arith.constant 0.000000e+00 : f32
    %156 = vector.broadcast %cst_19 : f32 to vector<1x512xf32>
    %157 = arith.select %155, %150, %156 : vector<1x512xi1>, vector<1x512xf32>
    %158 = vector.extract_strided_slice %157 {offsets = [0, 0], sizes = [1, 256], strides = [1, 1]} : vector<1x512xf32> to vector<1x256xf32>
    %c6 = arith.constant 6 : index
    %159 = memref.load %arg2[%c6] : memref<36xf32, #tpu.memory_space<smem>>
    %160 = vector.broadcast %159 : f32 to vector<1x256xf32>
    %161 = arith.mulf %158, %160 : vector<1x256xf32>
    %162 = arith.addf %145, %161 : vector<1x256xf32>
    %c24 = arith.constant 24 : index
    %163 = memref.load %arg2[%c24] : memref<36xf32, #tpu.memory_space<smem>>
    %164 = vector.broadcast %163 : f32 to vector<1x256xf32>
    %165 = arith.mulf %158, %164 : vector<1x256xf32>
    %166 = arith.addf %149, %165 : vector<1x256xf32>
    %167 = vector.extract_strided_slice %157 {offsets = [0, 256], sizes = [1, 256], strides = [1, 1]} : vector<1x512xf32> to vector<1x256xf32>
    %c15 = arith.constant 15 : index
    %168 = memref.load %arg2[%c15] : memref<36xf32, #tpu.memory_space<smem>>
    %169 = vector.broadcast %168 : f32 to vector<1x256xf32>
    %170 = arith.mulf %167, %169 : vector<1x256xf32>
    %171 = arith.addf %162, %170 : vector<1x256xf32>
    %c33 = arith.constant 33 : index
    %172 = memref.load %arg2[%c33] : memref<36xf32, #tpu.memory_space<smem>>
    %173 = vector.broadcast %172 : f32 to vector<1x256xf32>
    %174 = arith.mulf %167, %173 : vector<1x256xf32>
    %175 = arith.addf %166, %174 : vector<1x256xf32>
    %c496_i32 = arith.constant 496 : i32
    %176 = tpu.dynamic_rotate %1 by %c496_i32 dim 1 : vector<1x512xf32>, i32 -> vector<1x512xf32>
    %c15_i32_20 = arith.constant 15 : i32
    %177 = vector.broadcast %c15_i32_20 : i32 to vector<1x512xi32>
    %178 = arith.cmpi slt, %8, %177 : vector<1x512xi32>
    %cst_21 = arith.constant 0.000000e+00 : f32
    %179 = vector.broadcast %cst_21 : f32 to vector<1x512xf32>
    %180 = arith.select %178, %176, %179 : vector<1x512xi1>, vector<1x512xf32>
    %181 = vector.extract_strided_slice %180 {offsets = [0, 0], sizes = [1, 256], strides = [1, 1]} : vector<1x512xf32> to vector<1x256xf32>
    %c7 = arith.constant 7 : index
    %182 = memref.load %arg2[%c7] : memref<36xf32, #tpu.memory_space<smem>>
    %183 = vector.broadcast %182 : f32 to vector<1x256xf32>
    %184 = arith.mulf %181, %183 : vector<1x256xf32>
    %185 = arith.addf %171, %184 : vector<1x256xf32>
    %c25 = arith.constant 25 : index
    %186 = memref.load %arg2[%c25] : memref<36xf32, #tpu.memory_space<smem>>
    %187 = vector.broadcast %186 : f32 to vector<1x256xf32>
    %188 = arith.mulf %181, %187 : vector<1x256xf32>
    %189 = arith.addf %175, %188 : vector<1x256xf32>
    %190 = vector.extract_strided_slice %180 {offsets = [0, 256], sizes = [1, 256], strides = [1, 1]} : vector<1x512xf32> to vector<1x256xf32>
    %c16 = arith.constant 16 : index
    %191 = memref.load %arg2[%c16] : memref<36xf32, #tpu.memory_space<smem>>
    %192 = vector.broadcast %191 : f32 to vector<1x256xf32>
    %193 = arith.mulf %190, %192 : vector<1x256xf32>
    %194 = arith.addf %185, %193 : vector<1x256xf32>
    %c34 = arith.constant 34 : index
    %195 = memref.load %arg2[%c34] : memref<36xf32, #tpu.memory_space<smem>>
    %196 = vector.broadcast %195 : f32 to vector<1x256xf32>
    %197 = arith.mulf %190, %196 : vector<1x256xf32>
    %198 = arith.addf %189, %197 : vector<1x256xf32>
    %c495_i32 = arith.constant 495 : i32
    %199 = tpu.dynamic_rotate %1 by %c495_i32 dim 1 : vector<1x512xf32>, i32 -> vector<1x512xf32>
    %c15_i32_22 = arith.constant 15 : i32
    %200 = vector.broadcast %c15_i32_22 : i32 to vector<1x512xi32>
    %201 = arith.cmpi slt, %8, %200 : vector<1x512xi32>
    %c15_i32_23 = arith.constant 15 : i32
    %202 = vector.broadcast %c15_i32_23 : i32 to vector<1x512xi32>
    %203 = arith.cmpi slt, %4, %202 : vector<1x512xi32>
    %204 = arith.andi %201, %203 : vector<1x512xi1>
    %cst_24 = arith.constant 0.000000e+00 : f32
    %205 = vector.broadcast %cst_24 : f32 to vector<1x512xf32>
    %206 = arith.select %204, %199, %205 : vector<1x512xi1>, vector<1x512xf32>
    %207 = vector.extract_strided_slice %206 {offsets = [0, 0], sizes = [1, 256], strides = [1, 1]} : vector<1x512xf32> to vector<1x256xf32>
    %c8 = arith.constant 8 : index
    %208 = memref.load %arg2[%c8] : memref<36xf32, #tpu.memory_space<smem>>
    %209 = vector.broadcast %208 : f32 to vector<1x256xf32>
    %210 = arith.mulf %207, %209 : vector<1x256xf32>
    %211 = arith.addf %194, %210 : vector<1x256xf32>
    %c26 = arith.constant 26 : index
    %212 = memref.load %arg2[%c26] : memref<36xf32, #tpu.memory_space<smem>>
    %213 = vector.broadcast %212 : f32 to vector<1x256xf32>
    %214 = arith.mulf %207, %213 : vector<1x256xf32>
    %215 = arith.addf %198, %214 : vector<1x256xf32>
    %216 = vector.extract_strided_slice %206 {offsets = [0, 256], sizes = [1, 256], strides = [1, 1]} : vector<1x512xf32> to vector<1x256xf32>
    %c17 = arith.constant 17 : index
    %217 = memref.load %arg2[%c17] : memref<36xf32, #tpu.memory_space<smem>>
    %218 = vector.broadcast %217 : f32 to vector<1x256xf32>
    %219 = arith.mulf %216, %218 : vector<1x256xf32>
    %220 = arith.addf %211, %219 : vector<1x256xf32>
    %c35 = arith.constant 35 : index
    %221 = memref.load %arg2[%c35] : memref<36xf32, #tpu.memory_space<smem>>
    %222 = vector.broadcast %221 : f32 to vector<1x256xf32>
    %223 = arith.mulf %216, %222 : vector<1x256xf32>
    %224 = arith.addf %215, %223 : vector<1x256xf32>
    %225 = tpu.concatenate %220, %224 in 1 : vector<1x256xf32>, vector<1x256xf32> -> vector<1x512xf32>
    %c0_25 = arith.constant 0 : index
    %c0_26 = arith.constant 0 : index
    %c0_27 = arith.constant 0 : index
    %226 = vector.load %arg3[%c0_25, %c0_26, %c0_27] : memref<1x1x512xf32, #tpu.memory_space<vmem>>, vector<1x1x512xf32>
    %227 = vector.shape_cast %226 : vector<1x1x512xf32> to vector<1x512xf32>
    %228 = vector.shape_cast %225 : vector<1x512xf32> to vector<1x1x512xf32>
    tpu.vector_store %arg3[%c0_25, %c0_26, %c0_27], %228 {strides = array<i32>} : memref<1x1x512xf32, #tpu.memory_space<vmem>>, vector<1x1x512xf32>,
    return
  }
  func.func @transform_0(%arg0: i32) -> (i32, i32, i32) {
    %c0_i32 = arith.constant 0 : i32
    %c0_i32_0 = arith.constant 0 : i32
    %c0_i32_1 = arith.constant 0 : i32
    return %arg0, %c0_i32, %c0_i32_0 : i32, i32, i32
  }
  func.func @transform_1(%arg0: i32) -> i32 {
    %c0_i32 = arith.constant 0 : i32
    %c0_i32_0 = arith.constant 0 : i32
    return %c0_i32 : i32
  }
  func.func @transform_2(%arg0: i32) -> (i32, i32, i32) {
    %c0_i32 = arith.constant 0 : i32
    %c0_i32_0 = arith.constant 0 : i32
    %c0_i32_1 = arith.constant 0 : i32
    return %arg0, %c0_i32, %c0_i32_0 : i32, i32, i32
  }
}

</mosaic_0001>

<llo_original>
// kernel: tpu_custom_call.1
$region0: #{tpu_custom_call.1}
  #allocation0 [shape = 'u32[]', space=smem, size = 0x4, offset = 0x4, fixed_abs, tag = 'smem constant byte address 0x4 - core index']
  #allocation1 [shape = 'u32[144,128]{1,0:T(1,128)}', space=vmem, size = 0x12000, scoped, tag = 'internal scratch']
  %s0 = inlined_call_operand.hbm [shape: f32[2,1,2048], index: 0, kind: input, shape index: {}, may-alias: {0,2}]
  %s1 = inlined_call_operand.vmem [shape: f32[36], index: 1, kind: input, shape index: {}]
  %s2 = inlined_call_operand.hbm [shape: f32[2,1,2048], index: 2, kind: output, shape index: {}, may-alias: {0,2}]
  %s3 = sld [smem:[#allocation0]]
  $region49: #{tpu_custom_call.1} parent=0
    _
  %s5 = ssub.s32 1, %s3
  %s6 = scalar_select 0, %s5, %s3
  $region1: #{tpu_custom_call.1} parent=0
    #allocation2 [shape = 'u8[4096]{0}', space=vmem, size = 0x1000, scoped, tag = 'input window, operand 0']
    #allocation3 [shape = 's32[2]{0}', space=sflag, size = 0x8, scoped, tag = 'scoped memory for tpu_custom_call.1']
    #allocation4 [shape = 's32[2]{0}', space=sflag, size = 0x8, scoped, tag = 'scoped memory for tpu_custom_call.1']
    #allocation5 [shape = 's32[2]{0}', space=sflag, size = 0x8, scoped, tag = 'scoped memory for tpu_custom_call.1']
    #allocation6 [shape = 'u8[512]{0}', space=smem, size = 0x200, scoped, tag = 'input window, operand 1, single buffered']
    #allocation7 [shape = 'u8[4096]{0}', space=vmem, size = 0x1000, scoped, tag = 'output window, operand 0']
    %7 = vsyncpa [#allocation3], 0
    %s8 = scalar_lea.sflag [#allocation3], 1
    %9 = vsyncpa %s8, 0
    %10 = vsyncpa [#allocation5], 0
    %11 = vsyncpa [#allocation4], 0
    %s12 = scalar_lea.sflag [#allocation4], 1
    %13 = vsyncpa %s12, 0
    loop: start=0, step=1, limit=4
    $region2: #{tpu_custom_call.1} parent=1 // loop_pre_header
      _
    $region3: #{tpu_custom_call.1} parent=1 // loop_header
      %s15 = sphi 0, %s19
      %p16 = scmp.ge.s32.totalorder %s15, 4
      %s25 = sphi 0, %s27
      %s28 = sphi 0, %s25
      %s29 = sphi 0, %s28
      %s45 = sphi 0, %s29
      %s49 = sphi 0, %s49
      %s51 = sphi 0, %s49
      %s52 = sphi 0, %s51
      %s66 = sphi 0, %s52
      %s72 = sphi 0, %s74
      %s75 = sphi 0, %s72
      %s76 = sphi 0, %s75
      %s92 = sphi 0, %s76
    $region4: #{tpu_custom_call.1} parent=1 // loop_header_branch
      %18 = sbr.rel (%p16) target = $region8
    $region5: #{tpu_custom_call.1} parent=1 // loop_body
      %s20 = ssub.s32 %s15, 1
      %s21 = ssub.s32 %s15, 2
      %s22 = sadd.s32 %s15, 1
      %s23 = ssub.s32 %s15, %s22
      %p24 = scmp.eq.s32.totalorder %s23, 0
      %s26 = sadd.s32 %s25, 1
      %s27 = scalar_select %p24, %s25, %s26
      %p30 = pneg %p24
      %p31 = scmp.eq.s32.totalorder %s15, 1
      %p32 = por %p30, %p31
      %p33 = scmp.ne.s32.totalorder %s25, %s28
      %p34 = scmp.eq.s32.totalorder %s15, 0
      %p35 = por %p33, %p34
      %p36 = scmp.ne.s32.totalorder %s25, %s28
      %p37 = scmp.eq.s32.totalorder %s20, 1
      %p38 = por %p36, %p37
      %p39 = scmp.ne.s32.totalorder %s28, %s29
      %p40 = scmp.eq.s32.totalorder %s20, 0
      %p41 = por %p39, %p40
      %p42 = scmp.ne.s32.totalorder %s28, %s29
      %p43 = scmp.eq.s32.totalorder %s21, 1
      %p44 = por %p42, %p43
      %p46 = scmp.ne.s32.totalorder %s29, %s45
      %p47 = scmp.eq.s32.totalorder %s21, 0
      %p48 = por %p46, %p47
      %s50 = sadd.s32 %s49, 1
      %p53 = scmp.eq.s32.totalorder %s15, 1
      %p54 = scmp.ne.s32.totalorder %s49, %s51
      %p55 = scmp.eq.s32.totalorder %s15, 0
      %p56 = por %p54, %p55
      %p57 = scmp.ne.s32.totalorder %s49, %s51
      %p58 = scmp.eq.s32.totalorder %s20, 1
      %p59 = por %p57, %p58
      %p60 = scmp.ne.s32.totalorder %s51, %s52
      %p61 = scmp.eq.s32.totalorder %s20, 0
      %p62 = por %p60, %p61
      %p63 = scmp.ne.s32.totalorder %s51, %s52
      %p64 = scmp.eq.s32.totalorder %s21, 1
      %p65 = por %p63, %p64
      %p67 = scmp.ne.s32.totalorder %s52, %s66
      %p68 = scmp.eq.s32.totalorder %s21, 0
      %p69 = por %p67, %p68
      %s70 = ssub.s32 %s15, %s22
      %p71 = scmp.eq.s32.totalorder %s70, 0
      %s73 = sadd.s32 %s72, 1
      %s74 = scalar_select %p71, %s72, %s73
      %p77 = pneg %p71
      %p78 = scmp.eq.s32.totalorder %s15, 1
      %p79 = por %p77, %p78
      %p80 = scmp.ne.s32.totalorder %s72, %s75
      %p81 = scmp.eq.s32.totalorder %s15, 0
      %p82 = por %p80, %p81
      %p83 = scmp.ne.s32.totalorder %s72, %s75
      %p84 = scmp.eq.s32.totalorder %s20, 1
      %p85 = por %p83, %p84
      %p86 = scmp.ne.s32.totalorder %s75, %s76
      %p87 = scmp.eq.s32.totalorder %s20, 0
      %p88 = por %p86, %p87
      %p89 = scmp.ne.s32.totalorder %s75, %s76
      %p90 = scmp.eq.s32.totalorder %s21, 1
      %p91 = por %p89, %p90
      %p93 = scmp.ne.s32.totalorder %s76, %s92
      %p94 = scmp.eq.s32.totalorder %s21, 0
      %p95 = por %p93, %p94
      %p96 = scmp.le.s32.totalorder 1, %s15
      %p97 = scmp.lt.s32.totalorder %s15, 3
      %p98 = pnand %p96, %p97
      %p99 = pneg %p98
      // Predicated region
      $region9: #{tpu_custom_call.1} parent=5 // pred_check
        _
      $region10: #{tpu_custom_call.1} parent=5 // pred_check_branch
        %101 = sbr.rel (%p98) target = $region12
      $region11: #{tpu_custom_call.1} parent=5 // pred_region
        %s102 = ssub.s32 %s15, 1
        // Predicated region
        $region13: #{tpu_custom_call.1} parent=11 // pred_check
          %p103 = pneg %p62
        $region14: #{tpu_custom_call.1} parent=11 // pred_check_branch
          %105 = sbr.rel (%p103) target = $region16
        $region15: #{tpu_custom_call.1} parent=11 // pred_region
          %s107 = ssub.s32 16, 16
          %108 = vsyncadd [#allocation5], %s107
          %s110 = sshll.u32 %s1, 4
          %s111 = int_to_ptr.vmem [resolvable:$true] %s110
          %113 = dma.vmem_to_smem %s111, 16, [#allocation6], [#allocation5]
        $region16: #{tpu_custom_call.1} parent=11 // pred_fallthru
          _
      $region12: #{tpu_custom_call.1} parent=5 // pred_fallthru
        _
      %p114 = scmp.lt.s32.totalorder %s15, 2
      // Predicated region
      $region17: #{tpu_custom_call.1} parent=5 // pred_check
        %p115 = pneg %p114
      $region18: #{tpu_custom_call.1} parent=5 // pred_check_branch
        %117 = sbr.rel (%p115) target = $region20
      $region19: #{tpu_custom_call.1} parent=5 // pred_region
        // Predicated region
        $region21: #{tpu_custom_call.1} parent=19 // pred_check
          %p118 = pneg %p35
        $region22: #{tpu_custom_call.1} parent=19 // pred_check_branch
          %120 = sbr.rel (%p118) target = $region24
        $region23: #{tpu_custom_call.1} parent=19 // pred_region
          %s121 = sand.u32 %s25, 1
          %s122 = scalar_lea.sflag [#allocation3], %s121
          %s123 = sand.u32 %s25, 1
          %s124 = smul.addr %s123, 4
          %s125 = scalar_lea.vmem [#allocation2], %s124
          %s127 = ssub.s32 64, 64
          %128 = vsyncadd %s122, %s127
          %s129 = smul.addr %s15, 16
          %s130 = smul.addr %s129, 16
          %s131 = scalar_lea.hbm %s0, %s130
          %s133 = sshll.u32 %s125, 4
          %s134 = int_to_ptr.vmem [resolvable:$true] %s133
          %136 = dma.hbm_to_vmem [thread:$0]  %s131, 64, %s134, %s122
        $region24: #{tpu_custom_call.1} parent=19 // pred_fallthru
          _
      $region20: #{tpu_custom_call.1} parent=5 // pred_fallthru
        _
      %p137 = scmp.le.s32.totalorder 1, %s15
      %p138 = scmp.lt.s32.totalorder %s15, 3
      %p139 = pnand %p137, %p138
      %p140 = pneg %p139
      // Predicated region
      $region25: #{tpu_custom_call.1} parent=5 // pred_check
        _
      $region26: #{tpu_custom_call.1} parent=5 // pred_check_branch
        %142 = sbr.rel (%p139) target = $region28
      $region27: #{tpu_custom_call.1} parent=5 // pred_region
        %s143 = ssub.s32 %s15, 1
        %s144 = sand.u32 %s28, 1
        %s145 = scalar_lea.sflag [#allocation3], %s144
        %s146 = sand.u32 %s28, 1
        %s147 = smul.addr %s146, 4
        %s148 = scalar_lea.vmem [#allocation2], %s147
        // Predicated region
        $region29: #{tpu_custom_call.1} parent=27 // pred_check
          %p149 = pneg %p41
        $region30: #{tpu_custom_call.1} parent=27 // pred_check_branch
          %151 = sbr.rel (%p149) target = $region32
        $region31: #{tpu_custom_call.1} parent=27 // pred_region
          %152 = dma.done %s145, 64
        $region32: #{tpu_custom_call.1} parent=27 // pred_fallthru
          _
        // Predicated region
        $region33: #{tpu_custom_call.1} parent=27 // pred_check
          %p153 = pneg %p62
        $region34: #{tpu_custom_call.1} parent=27 // pred_check_branch
          %155 = sbr.rel (%p153) target = $region36
        $region35: #{tpu_custom_call.1} parent=27 // pred_region
          %156 = dma.done [#allocation5], 16
        $region36: #{tpu_custom_call.1} parent=27 // pred_fallthru
          _
        %157 = sfence
        %s158 = sand.u32 %s28, 1
        %s159 = scalar_lea.sflag [#allocation3], %s158
        %s160 = sand.u32 %s28, 1
        %s161 = smul.addr %s160, 4
        %s162 = scalar_lea.vmem [#allocation2], %s161
        %p163 = pneg %p41
        %p164 = pneg %p38
        %p165 = pneg %p62
        %p166 = pneg %p59
        %p167 = pneg %p88
        %p168 = pneg %p85
        %s169 = sand.u32 %s75, 1
        %s170 = scalar_lea.sflag [#allocation4], %s169
        %s171 = sand.u32 %s75, 1
        %s172 = smul.addr %s171, 4
        %s173 = scalar_lea.vmem [#allocation7], %s172
        %v174 = vld [vmem:[%s148] sm:$0xf]
        %v175 = vlaneseq
        %v176 = vand.u32 %v175, 127
        %v177 = vadd.s32 %v176, 128
        %v178 = vadd.s32 %v176, 256
        %v179 = vadd.s32 %v176, 384
        %v180 = vand.u32 %v176, 15
        %v181 = vand.u32 %v177, 15
        %v182 = vand.u32 %v178, 15
        %v183 = vand.u32 %v179, 15
        %v184 = vand.u32 %v176, 255
        %v185 = vand.u32 %v177, 255
        %v186 = vand.u32 %v178, 255
        %v187 = vand.u32 %v179, 255
        %v188 = vshra.s32 %v184, 4
        %v189 = vshra.s32 %v185, 4
        %v190 = vshra.s32 %v186, 4
        %v191 = vshra.s32 %v187, 4
        %v193 = vlaneseq
        %v194 = vshrl.u32 %v193, 7
        %v195 = vsub.s32 0, %v194
        %v196 = vrot.slane %v174, %v195
        %v197 = vlaneseq
        %v198 = vshrl.u32 %v197, 7
        %v199 = vsub.s32 1, %v198
        %v200 = vrot.slane %v174, %v199
        %v201 = vlaneseq
        %v202 = vshrl.u32 %v201, 7
        %v203 = vsub.s32 2, %v202
        %v204 = vrot.slane %v174, %v203
        %v205 = vlaneseq
        %v206 = vshrl.u32 %v205, 7
        %v207 = vsub.s32 3, %v206
        %v208 = vrot.slane %v174, %v207
        %213 = vrot.lane.b32.xlu0 %v196, 17
        %v214 = vpop.permute.xlu0 %213
        %215 = vrot.lane.b32.xlu0 %v200, 17
        %v216 = vpop.permute.xlu0 %215
        %217 = vrot.lane.b32.xlu0 %v204, 17
        %v218 = vpop.permute.xlu0 %217
        %219 = vrot.lane.b32.xlu0 %v208, 17
        %v220 = vpop.permute.xlu0 %219
        %vm221 = vcmp.lt.s32.totalorder %v176, 17
        %v222 = vsel %vm221, %v218, %v220
        %v223 = vsel %vm221, %v216, %v218
        %v224 = vsel %vm221, %v214, %v216
        %v225 = vsel %vm221, %v220, %v214
        %vm226 = vcmp.ge.s32.totalorder %v188, 1
        %vm227 = vcmp.ge.s32.totalorder %v189, 1
        %vm228 = vcmp.ge.s32.totalorder %v190, 1
        %vm229 = vcmp.ge.s32.totalorder %v191, 1
        %vm230 = vcmp.ge.s32.totalorder %v180, 1
        %vm231 = vcmp.ge.s32.totalorder %v181, 1
        %vm232 = vcmp.ge.s32.totalorder %v182, 1
        %vm233 = vcmp.ge.s32.totalorder %v183, 1
        %vm234 = vmand %vm226, %vm230
        %vm235 = vmand %vm227, %vm231
        %vm236 = vmand %vm228, %vm232
        %vm237 = vmand %vm229, %vm233
        %v238 = vsel %vm234, %v225, 0.0
        %v239 = vsel %vm235, %v224, 0.0
        %v240 = vsel %vm236, %v223, 0.0
        %v241 = vsel %vm237, %v222, 0.0
        %s242 = sld [smem:[#allocation6]]
        %v243 = vstv %s242
        %v244 = vmul.f32 %v238, %v243
        %v245 = vmul.f32 %v239, %v243
        %v246 = vadd.f32 %v244, 0.0
        %v247 = vadd.f32 %v245, 0.0
        %s248 = sld [smem:[#allocation6 + $0x12]]
        %v249 = vstv %s248
        %v250 = vmul.f32 %v238, %v249
        %v251 = vmul.f32 %v239, %v249
        %v252 = vadd.f32 %v250, 0.0
        %v253 = vadd.f32 %v251, 0.0
        %s254 = sld [smem:[#allocation6 + $0x9]]
        %v255 = vstv %s254
        %v256 = vmul.f32 %v240, %v255
        %v257 = vmul.f32 %v241, %v255
        %v258 = vadd.f32 %v246, %v256
        %v259 = vadd.f32 %v247, %v257
        %s260 = sld [smem:[#allocation6 + $0x1b]]
        %v261 = vstv %s260
        %v262 = vmul.f32 %v240, %v261
        %v263 = vmul.f32 %v241, %v261
        %v264 = vadd.f32 %v252, %v262
        %v265 = vadd.f32 %v253, %v263
        %266 = vrot.lane.b32.xlu0 %v196, 16
        %v267 = vpop.permute.xlu0 %266
        %268 = vrot.lane.b32.xlu0 %v200, 16
        %v269 = vpop.permute.xlu0 %268
        %270 = vrot.lane.b32.xlu0 %v204, 16
        %v271 = vpop.permute.xlu0 %270
        %272 = vrot.lane.b32.xlu0 %v208, 16
        %v273 = vpop.permute.xlu0 %272
        %vm274 = vcmp.lt.s32.totalorder %v176, 16
        %v275 = vsel %vm274, %v271, %v273
        %v276 = vsel %vm274, %v269, %v271
        %v277 = vsel %vm274, %v267, %v269
        %v278 = vsel %vm274, %v273, %v267
        %v279 = vsel %vm226, %v278, 0.0
        %v280 = vsel %vm227, %v277, 0.0
        %v281 = vsel %vm228, %v276, 0.0
        %v282 = vsel %vm229, %v275, 0.0
        %s283 = sld [smem:[#allocation6 + $0x1]]
        %v284 = vstv %s283
        %v285 = vmul.f32 %v279, %v284
        %v286 = vmul.f32 %v280, %v284
        %v287 = vadd.f32 %v258, %v285
        %v288 = vadd.f32 %v259, %v286
        %s289 = sld [smem:[#allocation6 + $0x13]]
        %v290 = vstv %s289
        %v291 = vmul.f32 %v279, %v290
        %v292 = vmul.f32 %v280, %v290
        %v293 = vadd.f32 %v264, %v291
        %v294 = vadd.f32 %v265, %v292
        %s295 = sld [smem:[#allocation6 + $0xa]]
        %v296 = vstv %s295
        %v297 = vmul.f32 %v281, %v296
        %v298 = vmul.f32 %v282, %v296
        %v299 = vadd.f32 %v287, %v297
        %v300 = vadd.f32 %v288, %v298
        %s301 = sld [smem:[#allocation6 + $0x1c]]
        %v302 = vstv %s301
        %v303 = vmul.f32 %v281, %v302
        %v304 = vmul.f32 %v282, %v302
        %v305 = vadd.f32 %v293, %v303
        %v306 = vadd.f32 %v294, %v304
        %307 = vrot.lane.b32.xlu0 %v196, 15
        %v308 = vpop.permute.xlu0 %307
        %309 = vrot.lane.b32.xlu0 %v200, 15
        %v310 = vpop.permute.xlu0 %309
        %311 = vrot.lane.b32.xlu0 %v204, 15
        %v312 = vpop.permute.xlu0 %311
        %313 = vrot.lane.b32.xlu0 %v208, 15
        %v314 = vpop.permute.xlu0 %313
        %vm315 = vcmp.lt.s32.totalorder %v176, 15
        %v316 = vsel %vm315, %v312, %v314
        %v317 = vsel %vm315, %v310, %v312
        %v318 = vsel %vm315, %v308, %v310
        %v319 = vsel %vm315, %v314, %v308
        %vm320 = vcmp.lt.s32.totalorder %v180, 15
        %vm321 = vcmp.lt.s32.totalorder %v181, 15
        %vm322 = vcmp.lt.s32.totalorder %v182, 15
        %vm323 = vcmp.lt.s32.totalorder %v183, 15
        %vm324 = vmand %vm226, %vm320
        %vm325 = vmand %vm227, %vm321
        %vm326 = vmand %vm228, %vm322
        %vm327 = vmand %vm229, %vm323
        %v328 = vsel %vm324, %v319, 0.0
        %v329 = vsel %vm325, %v318, 0.0
        %v330 = vsel %vm326, %v317, 0.0
        %v331 = vsel %vm327, %v316, 0.0
        %s332 = sld [smem:[#allocation6 + $0x2]]
        %v333 = vstv %s332
        %v334 = vmul.f32 %v328, %v333
        %v335 = vmul.f32 %v329, %v333
        %v336 = vadd.f32 %v299, %v334
        %v337 = vadd.f32 %v300, %v335
        %s338 = sld [smem:[#allocation6 + $0x14]]
        %v339 = vstv %s338
        %v340 = vmul.f32 %v328, %v339
        %v341 = vmul.f32 %v329, %v339
        %v342 = vadd.f32 %v305, %v340
        %v343 = vadd.f32 %v306, %v341
        %s344 = sld [smem:[#allocation6 + $0xb]]
        %v345 = vstv %s344
        %v346 = vmul.f32 %v330, %v345
        %v347 = vmul.f32 %v331, %v345
        %v348 = vadd.f32 %v336, %v346
        %v349 = vadd.f32 %v337, %v347
        %s350 = sld [smem:[#allocation6 + $0x1d]]
        %v351 = vstv %s350
        %v352 = vmul.f32 %v330, %v351
        %v353 = vmul.f32 %v331, %v351
        %v354 = vadd.f32 %v342, %v352
        %v355 = vadd.f32 %v343, %v353
        %356 = vrot.lane.b32.xlu0 %v196, 1
        %v357 = vpop.permute.xlu0 %356
        %358 = vrot.lane.b32.xlu0 %v200, 1
        %v359 = vpop.permute.xlu0 %358
        %360 = vrot.lane.b32.xlu0 %v204, 1
        %v361 = vpop.permute.xlu0 %360
        %362 = vrot.lane.b32.xlu0 %v208, 1
        %v363 = vpop.permute.xlu0 %362
        %vm364 = vcmp.lt.s32.totalorder %v176, 1
        %v365 = vsel %vm364, %v361, %v363
        %v366 = vsel %vm364, %v359, %v361
        %v367 = vsel %vm364, %v357, %v359
        %v368 = vsel %vm364, %v363, %v357
        %v369 = vsel %vm230, %v368, 0.0
        %v370 = vsel %vm231, %v367, 0.0
        %v371 = vsel %vm232, %v366, 0.0
        %v372 = vsel %vm233, %v365, 0.0
        %s373 = sld [smem:[#allocation6 + $0x3]]
        %v374 = vstv %s373
        %v375 = vmul.f32 %v369, %v374
        %v376 = vmul.f32 %v370, %v374
        %v377 = vadd.f32 %v348, %v375
        %v378 = vadd.f32 %v349, %v376
        %s379 = sld [smem:[#allocation6 + $0x15]]
        %v380 = vstv %s379
        %v381 = vmul.f32 %v369, %v380
        %v382 = vmul.f32 %v370, %v380
        %v383 = vadd.f32 %v354, %v381
        %v384 = vadd.f32 %v355, %v382
        %s385 = sld [smem:[#allocation6 + $0xc]]
        %v386 = vstv %s385
        %v387 = vmul.f32 %v371, %v386
        %v388 = vmul.f32 %v372, %v386
        %v389 = vadd.f32 %v377, %v387
        %v390 = vadd.f32 %v378, %v388
        %s391 = sld [smem:[#allocation6 + $0x1e]]
        %v392 = vstv %s391
        %v393 = vmul.f32 %v371, %v392
        %v394 = vmul.f32 %v372, %v392
        %v395 = vadd.f32 %v383, %v393
        %v396 = vadd.f32 %v384, %v394
        %s397 = sld [smem:[#allocation6 + $0x4]]
        %v398 = vstv %s397
        %v399 = vmul.f32 %v174, %v398
        %v401 = vlaneseq
        %v402 = vshrl.u32 %v401, 7
        %v403 = vsub.s32 0, %v402
        %v404 = vrot.slane %v399, %v403
        %v405 = vlaneseq
        %v406 = vshrl.u32 %v405, 7
        %v407 = vsub.s32 1, %v406
        %v408 = vrot.slane %v399, %v407
        %v411 = vadd.f32 %v389, %v404
        %v412 = vadd.f32 %v390, %v408
        %s413 = sld [smem:[#allocation6 + $0x16]]
        %v414 = vstv %s413
        %v415 = vmul.f32 %v174, %v414
        %v417 = vlaneseq
        %v418 = vshrl.u32 %v417, 7
        %v419 = vsub.s32 0, %v418
        %v420 = vrot.slane %v415, %v419
        %v421 = vlaneseq
        %v422 = vshrl.u32 %v421, 7
        %v423 = vsub.s32 1, %v422
        %v424 = vrot.slane %v415, %v423
        %v427 = vadd.f32 %v395, %v420
        %v428 = vadd.f32 %v396, %v424
        %s429 = sld [smem:[#allocation6 + $0xd]]
        %v430 = vstv %s429
        %v431 = vrot.slane %v174, 2
        %v433 = vmul.f32 %v431, %v430
        %v435 = vlaneseq
        %v436 = vshrl.u32 %v435, 7
        %v437 = vsub.s32 0, %v436
        %v438 = vrot.slane %v433, %v437
        %v439 = vlaneseq
        %v440 = vshrl.u32 %v439, 7
        %v441 = vsub.s32 1, %v440
        %v442 = vrot.slane %v433, %v441
        %v445 = vadd.f32 %v411, %v438
        %v446 = vadd.f32 %v412, %v442
        %s447 = sld [smem:[#allocation6 + $0x1f]]
        %v448 = vstv %s447
        %v449 = vmul.f32 %v431, %v448
        %v451 = vlaneseq
        %v452 = vshrl.u32 %v451, 7
        %v453 = vsub.s32 0, %v452
        %v454 = vrot.slane %v449, %v453
        %v455 = vlaneseq
        %v456 = vshrl.u32 %v455, 7
        %v457 = vsub.s32 1, %v456
        %v458 = vrot.slane %v449, %v457
        %v461 = vadd.f32 %v427, %v454
        %v462 = vadd.f32 %v428, %v458
        %463 = vrot.lane.b32.xlu0 %v196, 127
        %v464 = vpop.permute.xlu0 %463
        %465 = vrot.lane.b32.xlu0 %v200, 127
        %v466 = vpop.permute.xlu0 %465
        %467 = vrot.lane.b32.xlu0 %v204, 127
        %v468 = vpop.permute.xlu0 %467
        %469 = vrot.lane.b32.xlu0 %v208, 127
        %v470 = vpop.permute.xlu0 %469
        %vm471 = vcmp.lt.s32.totalorder %v176, 127
        %v472 = vsel %vm471, %v468, %v470
        %v473 = vsel %vm471, %v466, %v468
        %v474 = vsel %vm471, %v464, %v466
        %v475 = vsel %vm471, %v470, %v464
        %v476 = vsel %vm320, %v474, 0.0
        %v477 = vsel %vm321, %v473, 0.0
        %v478 = vsel %vm322, %v472, 0.0
        %v479 = vsel %vm323, %v475, 0.0
        %s480 = sld [smem:[#allocation6 + $0x5]]
        %v481 = vstv %s480
        %v482 = vmul.f32 %v476, %v481
        %v483 = vmul.f32 %v477, %v481
        %v484 = vadd.f32 %v445, %v482
        %v485 = vadd.f32 %v446, %v483
        %s486 = sld [smem:[#allocation6 + $0x17]]
        %v487 = vstv %s486
        %v488 = vmul.f32 %v476, %v487
        %v489 = vmul.f32 %v477, %v487
        %v490 = vadd.f32 %v461, %v488
        %v491 = vadd.f32 %v462, %v489
        %s492 = sld [smem:[#allocation6 + $0xe]]
        %v493 = vstv %s492
        %v494 = vmul.f32 %v478, %v493
        %v495 = vmul.f32 %v479, %v493
        %v496 = vadd.f32 %v484, %v494
        %v497 = vadd.f32 %v485, %v495
        %s498 = sld [smem:[#allocation6 + $0x20]]
        %v499 = vstv %s498
        %v500 = vmul.f32 %v478, %v499
        %v501 = vmul.f32 %v479, %v499
        %v502 = vadd.f32 %v490, %v500
        %v503 = vadd.f32 %v491, %v501
        %504 = vrot.lane.b32.xlu0 %v196, 113
        %v505 = vpop.permute.xlu0 %504
        %506 = vrot.lane.b32.xlu0 %v200, 113
        %v507 = vpop.permute.xlu0 %506
        %508 = vrot.lane.b32.xlu0 %v204, 113
        %v509 = vpop.permute.xlu0 %508
        %510 = vrot.lane.b32.xlu0 %v208, 113
        %v511 = vpop.permute.xlu0 %510
        %vm512 = vcmp.lt.s32.totalorder %v176, 113
        %v513 = vsel %vm512, %v509, %v511
        %v514 = vsel %vm512, %v507, %v509
        %v515 = vsel %vm512, %v505, %v507
        %v516 = vsel %vm512, %v511, %v505
        %vm517 = vcmp.lt.s32.totalorder %v188, 15
        %vm518 = vcmp.lt.s32.totalorder %v189, 15
        %vm519 = vcmp.lt.s32.totalorder %v190, 15
        %vm520 = vcmp.lt.s32.totalorder %v191, 15
        %vm521 = vmand %vm517, %vm230
        %vm522 = vmand %vm518, %vm231
        %vm523 = vmand %vm519, %vm232
        %vm524 = vmand %vm520, %vm233
        %v525 = vsel %vm521, %v515, 0.0
        %v526 = vsel %vm522, %v514, 0.0
        %v527 = vsel %vm523, %v513, 0.0
        %v528 = vsel %vm524, %v516, 0.0
        %s529 = sld [smem:[#allocation6 + $0x6]]
        %v530 = vstv %s529
        %v531 = vmul.f32 %v525, %v530
        %v532 = vmul.f32 %v526, %v530
        %v533 = vadd.f32 %v496, %v531
        %v534 = vadd.f32 %v497, %v532
        %s535 = sld [smem:[#allocation6 + $0x18]]
        %v536 = vstv %s535
        %v537 = vmul.f32 %v525, %v536
        %v538 = vmul.f32 %v526, %v536
        %v539 = vadd.f32 %v502, %v537
        %v540 = vadd.f32 %v503, %v538
        %s541 = sld [smem:[#allocation6 + $0xf]]
        %v542 = vstv %s541
        %v543 = vmul.f32 %v527, %v542
        %v544 = vmul.f32 %v528, %v542
        %v545 = vadd.f32 %v533, %v543
        %v546 = vadd.f32 %v534, %v544
        %s547 = sld [smem:[#allocation6 + $0x21]]
        %v548 = vstv %s547
        %v549 = vmul.f32 %v527, %v548
        %v550 = vmul.f32 %v528, %v548
        %v551 = vadd.f32 %v539, %v549
        %v552 = vadd.f32 %v540, %v550
        %553 = vrot.lane.b32.xlu0 %v196, 112
        %v554 = vpop.permute.xlu0 %553
        %555 = vrot.lane.b32.xlu0 %v200, 112
        %v556 = vpop.permute.xlu0 %555
        %557 = vrot.lane.b32.xlu0 %v204, 112
        %v558 = vpop.permute.xlu0 %557
        %559 = vrot.lane.b32.xlu0 %v208, 112
        %v560 = vpop.permute.xlu0 %559
        %vm561 = vcmp.lt.s32.totalorder %v176, 112
        %v562 = vsel %vm561, %v558, %v560
        %v563 = vsel %vm561, %v556, %v558
        %v564 = vsel %vm561, %v554, %v556
        %v565 = vsel %vm561, %v560, %v554
        %v566 = vsel %vm517, %v564, 0.0
        %v567 = vsel %vm518, %v563, 0.0
        %v568 = vsel %vm519, %v562, 0.0
        %v569 = vsel %vm520, %v565, 0.0
        %s570 = sld [smem:[#allocation6 + $0x7]]
        %v571 = vstv %s570
        %v572 = vmul.f32 %v566, %v571
        %v573 = vmul.f32 %v567, %v571
        %v574 = vadd.f32 %v545, %v572
        %v575 = vadd.f32 %v546, %v573
        %s576 = sld [smem:[#allocation6 + $0x19]]
        %v577 = vstv %s576
        %v578 = vmul.f32 %v566, %v577
        %v579 = vmul.f32 %v567, %v577
        %v580 = vadd.f32 %v551, %v578
        %v581 = vadd.f32 %v552, %v579
        %s582 = sld [smem:[#allocation6 + $0x10]]
        %v583 = vstv %s582
        %v584 = vmul.f32 %v568, %v583
        %v585 = vmul.f32 %v569, %v583
        %v586 = vadd.f32 %v574, %v584
        %v587 = vadd.f32 %v575, %v585
        %s588 = sld [smem:[#allocation6 + $0x22]]
        %v589 = vstv %s588
        %v590 = vmul.f32 %v568, %v589
        %v591 = vmul.f32 %v569, %v589
        %v592 = vadd.f32 %v580, %v590
        %v593 = vadd.f32 %v581, %v591
        %594 = vrot.lane.b32.xlu0 %v196, 111
        %v595 = vpop.permute.xlu0 %594
        %596 = vrot.lane.b32.xlu0 %v200, 111
        %v597 = vpop.permute.xlu0 %596
        %598 = vrot.lane.b32.xlu0 %v204, 111
        %v599 = vpop.permute.xlu0 %598
        %600 = vrot.lane.b32.xlu0 %v208, 111
        %v601 = vpop.permute.xlu0 %600
        %vm602 = vcmp.lt.s32.totalorder %v176, 111
        %v603 = vsel %vm602, %v599, %v601
        %v604 = vsel %vm602, %v597, %v599
        %v605 = vsel %vm602, %v595, %v597
        %v606 = vsel %vm602, %v601, %v595
        %vm607 = vmand %vm517, %vm320
        %vm608 = vmand %vm518, %vm321
        %vm609 = vmand %vm519, %vm322
        %vm610 = vmand %vm520, %vm323
        %v611 = vsel %vm607, %v605, 0.0
        %v612 = vsel %vm608, %v604, 0.0
        %v613 = vsel %vm609, %v603, 0.0
        %v614 = vsel %vm610, %v606, 0.0
        %s615 = sld [smem:[#allocation6 + $0x8]]
        %v616 = vstv %s615
        %v617 = vmul.f32 %v611, %v616
        %v618 = vmul.f32 %v612, %v616
        %v619 = vadd.f32 %v586, %v617
        %v620 = vadd.f32 %v587, %v618
        %s621 = sld [smem:[#allocation6 + $0x1a]]
        %v622 = vstv %s621
        %v623 = vmul.f32 %v611, %v622
        %v624 = vmul.f32 %v612, %v622
        %v625 = vadd.f32 %v592, %v623
        %v626 = vadd.f32 %v593, %v624
        %s627 = sld [smem:[#allocation6 + $0x11]]
        %v628 = vstv %s627
        %v629 = vmul.f32 %v613, %v628
        %v630 = vmul.f32 %v614, %v628
        %v631 = vadd.f32 %v619, %v629
        %v632 = vadd.f32 %v620, %v630
        %s633 = sld [smem:[#allocation6 + $0x23]]
        %v634 = vstv %s633
        %v635 = vmul.f32 %v613, %v634
        %v636 = vmul.f32 %v614, %v634
        %v637 = vadd.f32 %v625, %v635
        %v638 = vadd.f32 %v626, %v636
        %v643 = vcombine.low %v631, %v632
        %v644 = vcombine.low %v637, %v638
        %v646 = vunpack.c.l.s4 1966171168
        %v647 = vunpack.c.0.s8 %v646
        %v648 = vlaneseq
        %v649 = vshrl.u32 %v648, 7
        %v650 = vsub.s32 %v647, %v649
        %v651 = vrot.slane %v643, %v650
        %v653 = vunpack.c.l.s4 1966171168
        %v654 = vunpack.c.0.s8 %v653
        %v655 = vlaneseq
        %v656 = vshrl.u32 %v655, 7
        %v657 = vsub.s32 %v654, %v656
        %v658 = vrot.slane %v644, %v657
        %v659 = vcombine.low %v651, %v658
        %v661 = vunpack.c.l.s4 1966171168
        %v662 = vunpack.c.0.s8 %v661
        %v663 = vlaneseq
        %v664 = vshrl.u32 %v663, 7
        %v665 = vsub.s32 %v662, %v664
        %v666 = vrot.slane %v659, %v665
        %v668 = vlaneseq
        %vm669 = vcmp.ge.s32.totalorder %v668, 0
        %vm670 = vcmp.lt.s32.totalorder %v668, 512
        %vm671 = vmand %vm669, %vm670
        %672 = vst.msk [vmem:[%s173] sm:$0xf] %vm671, %v666
        %s673 = sand.u32 %s75, 1
        %s674 = scalar_lea.sflag [#allocation4], %s673
        %s675 = sand.u32 %s75, 1
        %s676 = smul.addr %s675, 4
        %s677 = scalar_lea.vmem [#allocation7], %s676
        // Predicated region
        $region37: #{tpu_custom_call.1} parent=27 // pred_check
          %p678 = pneg %p85
        $region38: #{tpu_custom_call.1} parent=27 // pred_check_branch
          %680 = sbr.rel (%p678) target = $region40
        $region39: #{tpu_custom_call.1} parent=27 // pred_region
          %s682 = ssub.s32 64, 64
          %683 = vsyncadd %s674, %s682
          %s684 = smul.addr %s20, 16
          %s685 = smul.addr %s684, 16
          %s686 = scalar_lea.hbm %s2, %s685
          %s688 = sshll.u32 %s677, 4
          %s689 = int_to_ptr.vmem [resolvable:$true] %s688
          %691 = dma.vmem_to_hbm [thread:$0]  %s689, 64, %s686, %s674
        $region40: #{tpu_custom_call.1} parent=27 // pred_fallthru
          _
      $region28: #{tpu_custom_call.1} parent=5 // pred_fallthru
        _
      %p692 = scmp.le.s32.totalorder 2, %s15
      // Predicated region
      $region41: #{tpu_custom_call.1} parent=5 // pred_check
        %p693 = pneg %p692
      $region42: #{tpu_custom_call.1} parent=5 // pred_check_branch
        %695 = sbr.rel (%p693) target = $region44
      $region43: #{tpu_custom_call.1} parent=5 // pred_region
        %s696 = ssub.s32 %s15, 2
        // Predicated region
        $region45: #{tpu_custom_call.1} parent=43 // pred_check
          %p697 = pneg %p91
        $region46: #{tpu_custom_call.1} parent=43 // pred_check_branch
          %699 = sbr.rel (%p697) target = $region48
        $region47: #{tpu_custom_call.1} parent=43 // pred_region
          %s700 = sand.u32 %s76, 1
          %s701 = scalar_lea.sflag [#allocation4], %s700
          %s702 = sand.u32 %s76, 1
          %s703 = smul.addr %s702, 4
          %s704 = scalar_lea.vmem [#allocation7], %s703
          %705 = dma.done %s701, 64
        $region48: #{tpu_custom_call.1} parent=43 // pred_fallthru
          _
      $region44: #{tpu_custom_call.1} parent=5 // pred_fallthru
        _
    $region6: #{tpu_custom_call.1} parent=1 // loop_footer
      %s19 = sadd.s32 1, %s15
    $region7: #{tpu_custom_call.1} parent=1 // loop_footer_branch
      %14 = sbr.rel target = $region3
    $region8: #{tpu_custom_call.1} parent=1 // loop_exit
      _
    %706 = vsyncpa [#allocation3], 1
    %s707 = scalar_lea.sflag [#allocation3], 1
    %708 = vsyncpa %s707, 1
    %709 = vsyncpa [#allocation4], 1
    %s710 = scalar_lea.sflag [#allocation4], 1
    %711 = vsyncpa %s710, 1
    %712 = vsyncpa [#allocation5], 1
    %s713 = scalar_lea.sflag [#allocation5], 1
    %714 = vsyncpa %s713, 1

</llo_original>
